<compile_context>
chip_gen: v5e
topology: v5e:2x2
jax: 0.10.0
libtpu: 0.0.40
codegen_flags: <defaults>
</compile_context>

<pallas_src>
import functools
import numpy as np

import jax
import jax.numpy as jnp
from jax import lax
from jax.experimental import pallas as pl
from jax.experimental.pallas import tpu as pltpu


# ----------------------------------------------------------------------------
# helpers
# ----------------------------------------------------------------------------
def _resident(shape):
    """BlockSpec for an operand that is identical for every grid step."""
    zeros = (0,) * len(shape)
    return pl.BlockSpec(shape, lambda b, _z=zeros: _z)


# ----------------------------------------------------------------------------
# host-side constant construction (static, derived from the adjacency stack)
# ----------------------------------------------------------------------------
def build_gtn_constants(a_np, num_channels):
    """Layout constants so the kernel is pure matmuls (no reshapes/scatters).

    Index conventions (C channels, T edge types, N nodes):
      r      = c * T * N + t * N + i     expanded contraction axis (size C*T*N)
      p_full = v * (C*N) + c * N + i     stacked rows for the 3 GTConvs v=a,b,2
    """
    T, N, _ = a_np.shape
    C = num_channels
    G = 3 * C                      # stacked softmax rows [w1a_*, w1b_*, w2_*]
    two_n = C * N                  # block-diagonal operand size
    R = C * T * N

    # a_rows[r, c*N + j] = A[t, i, j]   (block c only -> block-diagonal output)
    a_rows = np.zeros((R, two_n), np.float32)
    for c in range(C):
        for t in range(T):
            r0 = c * T * N + t * N
            a_rows[r0:r0 + N, c * N:(c + 1) * N] = a_np[t]

    # mask[p_full, r] = (c(p) == c(r)) * (i(p) == i(r))
    mask = np.zeros((G * N, R), np.float32)
    for v in range(3):
        for c in range(C):
            for i in range(N):
                p = v * two_n + c * N + i
                for t in range(T):
                    mask[p, c * T * N + t * N + i] = 1.0

    # r_all[p_full, v*C + c] = 1   (row replication of the stacked softmax)
    r_all = np.zeros((G * N, G), np.float32)
    for v in range(3):
        for c in range(C):
            p0 = v * two_n + c * N
            r_all[p0:p0 + N, v * C + c] = 1.0

    # c_exp[t0, r] = (t0 == t(r))  (column replication of the stacked softmax)
    c_exp = np.zeros((T, R), np.float32)
    for c in range(C):
        for t in range(T):
            r0 = c * T * N + t * N
            c_exp[t, r0:r0 + N] = 1.0

    # rep2 stacks C copies of X@W; off_diag removes self loops of packed blocks
    rep2 = np.tile(np.eye(N, dtype=np.float32), (C, 1))          # (C*N, N)
    off_diag = 1.0 - np.eye(two_n, dtype=np.float32)             # (C*N, C*N)

    return dict(a_rows=jnp.asarray(a_rows), mask=jnp.asarray(mask),
                r_all=jnp.asarray(r_all), c_exp=jnp.asarray(c_exp),
                rep2=jnp.asarray(rep2), off_diag=jnp.asarray(off_diag))


# ----------------------------------------------------------------------------
# fused kernel: GTConv x3 + GT layers + normalization + GCN + ReLU + linear1
# ----------------------------------------------------------------------------
def gnn_fused_kernel(w_ref, rall_ref, cexp_ref, mask_ref, arows_ref, rep2_ref,
                     offdiag_ref, x_ref, wg_ref, bg_ref, wl_ref, bl_ref, o_ref,
                     *, num_channels, num_nodes, out_dim):
    f32 = jnp.float32
    two_n = num_channels * num_nodes

    # --- GTConv: softmax over edge types for all three convs at once --------
    w = w_ref[...]                                            # (3C, T)
    w = w - jnp.max(w, axis=1, keepdims=True)                 # stable softmax
    e = jnp.exp(w)
    f = e / jnp.sum(e, axis=1, keepdims=True)                 # (3C, T)

    # --- soft-select BLOCK-DIAGONAL adjacencies (channels packed) -----------
    # qq[v*2N + c*N + i, c*N + j] = sum_t f[v*C + c, t] * A[t, i, j]
    f_exp = jnp.dot(jnp.dot(rall_ref[...], f, preferred_element_type=f32),
                    cexp_ref[...], preferred_element_type=f32)    # (3*2N, C*T*N)
    qq = jnp.dot(f_exp * mask_ref[...], arows_ref[...],
                 preferred_element_type=f32)                      # (3*2N, 2N)
    qa = qq[0 * two_n:1 * two_n, :]
    qb = qq[1 * two_n:2 * two_n, :]
    q2 = qq[2 * two_n:3 * two_n, :]

    # --- normalization: self-loop removal + in-degree^-1 column scaling -----
    off_diag = offdiag_ref[...]                                   # hoisted mask

    def normalize(h):
        h = h * off_diag
        col = jnp.sum(h, axis=0, keepdims=True)                   # (1, 2N)
        nz = col != 0.0
        safe = jnp.where(nz, col, 1.0)
        r = pl.reciprocal(safe, approx=True)                      # EUP slot
        r = r * (2.0 - safe * r)                                  # 1 Newton step
        return h * jnp.where(nz, r, 0.0)

    h = normalize(jnp.dot(qa, qb, preferred_element_type=f32))    # GT layer 1
    h = normalize(jnp.dot(h, q2, preferred_element_type=f32))     # GT layer 2

    # --- GCNConv (+ReLU), channels still packed block-diagonally ------------
    xw = jnp.dot(x_ref[...], wg_ref[...], preferred_element_type=f32)   # (N, OUT)
    xw2 = jnp.dot(rep2_ref[...], xw, preferred_element_type=f32)        # (2N, OUT)
    # agg[q, o] = sum_p h[p, q] * xw2[p, o]  ==  blockdiag(H_c)^T @ [xw; xw]
    agg = lax.dot_general(h, xw2, (((0,), (0,)), ((), ())),
                          preferred_element_type=f32)                   # (2N, OUT)
    agg = jnp.maximum(agg + bg_ref[...], 0.0)                           # ReLU

    # --- linear1 on the channel concat == sum of per-channel partial matmuls
    wl = wl_ref[...]                                                    # (C*OUT, OUT)
    total = None
    for c in range(num_channels):  # C == 2, statically unrolled
        part = jnp.dot(agg[c * num_nodes:(c + 1) * num_nodes, :],
                       wl[c * out_dim:(c + 1) * out_dim, :],
                       preferred_element_type=f32)
        total = part if total is None else total + part
    o_ref[...] = (total + bl_ref[...]).astype(o_ref.dtype)


# ----------------------------------------------------------------------------
# wrapper: one pallas_call, grid over batched graph instances
# ----------------------------------------------------------------------------
def gnn_forward(params, A, x, consts=None):
    """x: (B, N, IN) batch of graph instances (or (N, IN) for a single graph)."""
    single = x.ndim == 2
    if single:
        x = x[None]
    B, N, IN = x.shape
    C, T = params["w1a"].shape
    OUT = params["w_gcn"].shape[1]
    two_n = C * N
    if consts is None:
        consts = build_gtn_constants(np.asarray(A), C)

    w_all = jnp.concatenate([params["w1a"], params["w1b"], params["w2"]], axis=0)
    x_flat = x.reshape(B * N, IN)

    kernel = functools.partial(gnn_fused_kernel, num_channels=C,
                               num_nodes=N, out_dim=OUT)

    # advisory cost hint so XLA schedules sensibly around the custom call
    R = C * T * N
    gn = 3 * C * N
    mm_flops = 2 * (gn * 3 * C * T + gn * T * R + gn * R * two_n + 2 * two_n ** 3
                    + N * IN * OUT + two_n * N * OUT + two_n * two_n * OUT
                    + C * N * OUT * OUT)
    cost = pl.CostEstimate(
        flops=int(B * (mm_flops + gn * R + 6 * two_n * two_n)),
        transcendentals=int(B * 3 * C * T),
        bytes_accessed=int(4 * (B * N * (IN + OUT) + 3 * C * T + gn * (3 * C + R)
                                + T * R + R * two_n + two_n * (N + two_n)
                                + IN * OUT + (C * OUT + 2) * OUT)))

    out_flat = pl.pallas_call(
        kernel,
        out_shape=jax.ShapeDtypeStruct((B * N, OUT), jnp.float32),
        grid=(B,),
        in_specs=[
            _resident(w_all.shape),                       # GTConv weights (3C, T)
            _resident(consts["r_all"].shape),
            _resident(consts["c_exp"].shape),
            _resident(consts["mask"].shape),
            _resident(consts["a_rows"].shape),
            _resident(consts["rep2"].shape),
            _resident(consts["off_diag"].shape),
            pl.BlockSpec((N, IN), lambda b: (b, 0)),      # per-instance features
            _resident(params["w_gcn"].shape),
            _resident(params["b_gcn"].shape),
            _resident(params["w_lin"].shape),
            _resident(params["b_lin"].shape),
        ],
        out_specs=pl.BlockSpec((N, OUT), lambda b: (b, 0)),
        compiler_params=pltpu.CompilerParams(dimension_semantics=("parallel",)),
        cost_estimate=cost,
    )(w_all, consts["r_all"], consts["c_exp"], consts["mask"], consts["a_rows"],
      consts["rep2"], consts["off_diag"], x_flat,
      params["w_gcn"], params["b_gcn"], params["w_lin"], params["b_lin"])

    out = out_flat.reshape(B, N, OUT)
    return out[0] if single else out


# ----------------------------------------------------------------------------
# adjacency construction, parameter setup, plain-JAX reference
# ----------------------------------------------------------------------------
def allstar_adjacency(n):
    """cg_edges='allstar': edge type k has edges (k, i) for all i != k."""
    a = np.zeros((n, n, n), dtype=np.float32)
    for k in range(n):
        for i in range(n):
            if i != k:
                a[k, k, i] = 1.0
    return jnp.asarray(a)


def init_params(key, n, c, in_dim, out_dim):
    ks = jax.random.split(key, 6)
    lim = 1.0 / np.sqrt(c * out_dim)
    return dict(
        # GTConv weights: nn.init.normal_(std=0.01), shape (num_channels, num_edge)
        w1a=0.01 * jax.random.normal(ks[0], (c, n), jnp.float32),
        w1b=0.01 * jax.random.normal(ks[1], (c, n), jnp.float32),
        w2=0.01 * jax.random.normal(ks[2], (c, n), jnp.float32),
        # GCNConv: glorot weight, zero bias
        w_gcn=jax.random.normal(ks[3], (in_dim, out_dim), jnp.float32)
        * np.sqrt(2.0 / (in_dim + out_dim)),
        b_gcn=jnp.zeros((1, out_dim), jnp.float32),
        # linear1: Linear(C*out_dim, out_dim), stored pre-transposed (C*OUT, OUT)
        w_lin=jax.random.uniform(ks[4], (c * out_dim, out_dim), jnp.float32, -lim, lim),
        b_lin=jax.random.uniform(ks[5], (1, out_dim), jnp.float32, -lim, lim),
    )


def gnn_reference(params, A, x):
    """Plain-JAX reference mirroring the torch/GTN semantics (batched over B)."""
    def conv(w):
        f = jax.nn.softmax(w, axis=1)
        return jnp.einsum("ct,tij->cij", f, A)

    def normalize(h):
        n = h.shape[-1]
        h = h * (1.0 - jnp.eye(n, dtype=h.dtype))
        col = h.sum(axis=-2, keepdims=True)
        inv = jnp.where(col == 0, 0.0, 1.0 / col)
        return h * inv

    qa, qb, q2 = conv(params["w1a"]), conv(params["w1b"]), conv(params["w2"])
    h = normalize(jnp.einsum("cij,cjk->cik", qa, qb))
    h = normalize(jnp.einsum("cij,cjk->cik", h, q2))
    xw = jnp.einsum("bni,io->bno", x, params["w_gcn"])
    aggs = [jax.nn.relu(jnp.einsum("ji,bjo->bio", h[c], xw) + params["b_gcn"])
            for c in range(h.shape[0])]
    xcat = jnp.concatenate(aggs, axis=-1)                        # (B, N, C*OUT)
    return jnp.einsum("bnk,ko->bno", xcat, params["w_lin"]) + params["b_lin"]


# ----------------------------------------------------------------------------
if __name__ == "__main__":
    # small config: 8 agents (nodes), allstar -> 8 edge types, num_channels=2,
    # num_layers=2, in_channels=32, out_channels=32, batch of 4 graph instances.
    B, N, C, IN, OUT = 4, 8, 2, 32, 32

    key = jax.random.PRNGKey(0)
    k_param, k_x = jax.random.split(key)
    params = init_params(k_param, N, C, IN, OUT)
    A = allstar_adjacency(N)                                    # (T=N, N, N)
    consts = build_gtn_constants(np.asarray(A), C)
    x = jax.random.normal(k_x, (B, N, IN), jnp.float32)         # node features

    # TODO(synk): eval-mode result caching in GNN.forward is host-side Python
    # state (not a kernel concern) and is intentionally not replicated here.
    out = jax.block_until_ready(gnn_forward(params, A, x, consts))   # (B, N, OUT)

    ref = jax.block_until_ready(gnn_reference(params, A, x))
    np.testing.assert_allclose(np.asarray(out), np.asarray(ref), rtol=1e-3, atol=1e-3)

    print("KERNEL_OK")
</pallas_src>

<mosaic_0001>
module attributes {stable_mosaic.version = 11 : i64} {
  func.func @gnn_fused_kernel(%arg0: i32, %arg1: memref<6x8xf32, #tpu.memory_space<vmem>>, %arg2: memref<48x6xf32, #tpu.memory_space<vmem>>, %arg3: memref<8x128xf32, #tpu.memory_space<vmem>>, %arg4: memref<48x128xf32, #tpu.memory_space<vmem>>, %arg5: memref<128x16xf32, #tpu.memory_space<vmem>>, %arg6: memref<16x8xf32, #tpu.memory_space<vmem>>, %arg7: memref<16x16xf32, #tpu.memory_space<vmem>>, %arg8: memref<8x32xf32, #tpu.memory_space<vmem>>, %arg9: memref<32x32xf32, #tpu.memory_space<vmem>>, %arg10: memref<1x32xf32, #tpu.memory_space<vmem>>, %arg11: memref<64x32xf32, #tpu.memory_space<vmem>>, %arg12: memref<1x32xf32, #tpu.memory_space<vmem>>, %arg13: memref<8x32xf32, #tpu.memory_space<vmem>>) attributes {dimension_semantics = [#tpu.dimension_semantics<parallel>], iteration_bounds = array<i64: 4>, scalar_prefetch = 0 : i64, scratch_operands = 0 : i64, tpu.core_type = #tpu.core_type<tc>, window_params = [{pipeline_mode = #tpu.pipeline_mode<synchronous>, transform_indices = @transform_0, window_bounds = array<i64: 6, 8>}, {pipeline_mode = #tpu.pipeline_mode<synchronous>, transform_indices = @transform_1, window_bounds = array<i64: 48, 6>}, {pipeline_mode = #tpu.pipeline_mode<synchronous>, transform_indices = @transform_2, window_bounds = array<i64: 8, 128>}, {pipeline_mode = #tpu.pipeline_mode<synchronous>, transform_indices = @transform_3, window_bounds = array<i64: 48, 128>}, {pipeline_mode = #tpu.pipeline_mode<synchronous>, transform_indices = @transform_4, window_bounds = array<i64: 128, 16>}, {pipeline_mode = #tpu.pipeline_mode<synchronous>, transform_indices = @transform_5, window_bounds = array<i64: 16, 8>}, {pipeline_mode = #tpu.pipeline_mode<synchronous>, transform_indices = @transform_6, window_bounds = array<i64: 16, 16>}, {transform_indices = @transform_7, window_bounds = array<i64: 8, 32>}, {pipeline_mode = #tpu.pipeline_mode<synchronous>, transform_indices = @transform_8, window_bounds = array<i64: 32, 32>}, {pipeline_mode = #tpu.pipeline_mode<synchronous>, transform_indices = @transform_9, window_bounds = array<i64: 1, 32>}, {pipeline_mode = #tpu.pipeline_mode<synchronous>, transform_indices = @transform_10, window_bounds = array<i64: 64, 32>}, {pipeline_mode = #tpu.pipeline_mode<synchronous>, transform_indices = @transform_11, window_bounds = array<i64: 1, 32>}, {transform_indices = @transform_12, window_bounds = array<i64: 8, 32>}]} {
    %c0 = arith.constant 0 : index
    %c0_0 = arith.constant 0 : index
    %0 = vector.load %arg1[%c0, %c0_0] : memref<6x8xf32, #tpu.memory_space<vmem>>, vector<6x8xf32>
    %cst = arith.constant dense<0xFF800000> : vector<6xf32>
    %1 = vector.multi_reduction <maximumf>, %0, %cst [1] : vector<6x8xf32> to vector<6xf32>
    %2 = vector.shape_cast %1 : vector<6xf32> to vector<6x1xf32>
    %3 = vector.broadcast %2 : vector<6x1xf32> to vector<6x8xf32>
    %4 = arith.subf %0, %3 : vector<6x8xf32>
    %5 = math.exp %4 : vector<6x8xf32>
    %cst_1 = arith.constant dense<0.000000e+00> : vector<6xf32>
    %6 = vector.multi_reduction <add>, %5, %cst_1 [1] : vector<6x8xf32> to vector<6xf32>
    %7 = vector.shape_cast %6 : vector<6xf32> to vector<6x1xf32>
    %8 = vector.broadcast %7 : vector<6x1xf32> to vector<6x8xf32>
    %9 = arith.divf %5, %8 : vector<6x8xf32>
    %c0_2 = arith.constant 0 : index
    %c0_3 = arith.constant 0 : index
    %10 = vector.load %arg2[%c0_2, %c0_3] : memref<48x6xf32, #tpu.memory_space<vmem>>, vector<48x6xf32>
    %cst_4 = arith.constant dense<0.000000e+00> : vector<48x8xf32>
    %11 = tpu.matmul %10, %9, %cst_4 {dimension_numbers = #tpu.dot_dimension_numbers<[1], [0], [0], [1], [0, 0, 1, 1], [], []>} : vector<48x6xf32>, vector<6x8xf32>, vector<48x8xf32> -> vector<48x8xf32>
    %c0_5 = arith.constant 0 : index
    %c0_6 = arith.constant 0 : index
    %12 = vector.load %arg3[%c0_5, %c0_6] : memref<8x128xf32, #tpu.memory_space<vmem>>, vector<8x128xf32>
    %cst_7 = arith.constant dense<0.000000e+00> : vector<48x128xf32>
    %13 = tpu.matmul %11, %12, %cst_7 {dimension_numbers = #tpu.dot_dimension_numbers<[1], [0], [0], [1], [0, 0, 1, 1], [], []>} : vector<48x8xf32>, vector<8x128xf32>, vector<48x128xf32> -> vector<48x128xf32>
    %c0_8 = arith.constant 0 : index
    %c0_9 = arith.constant 0 : index
    %14 = vector.load %arg4[%c0_8, %c0_9] : memref<48x128xf32, #tpu.memory_space<vmem>>, vector<48x128xf32>
    %15 = arith.mulf %13, %14 : vector<48x128xf32>
    %c0_10 = arith.constant 0 : index
    %c0_11 = arith.constant 0 : index
    %16 = vector.load %arg5[%c0_10, %c0_11] : memref<128x16xf32, #tpu.memory_space<vmem>>, vector<128x16xf32>
    %cst_12 = arith.constant dense<0.000000e+00> : vector<48x16xf32>
    %17 = tpu.matmul %15, %16, %cst_12 {dimension_numbers = #tpu.dot_dimension_numbers<[1], [0], [0], [1], [0, 0, 1, 1], [], []>} : vector<48x128xf32>, vector<128x16xf32>, vector<48x16xf32> -> vector<48x16xf32>
    %18 = vector.extract_strided_slice %17 {offsets = [0, 0], sizes = [16, 16], strides = [1, 1]} : vector<48x16xf32> to vector<16x16xf32>
    %19 = vector.extract_strided_slice %17 {offsets = [16, 0], sizes = [16, 16], strides = [1, 1]} : vector<48x16xf32> to vector<16x16xf32>
    %20 = vector.extract_strided_slice %17 {offsets = [32, 0], sizes = [16, 16], strides = [1, 1]} : vector<48x16xf32> to vector<16x16xf32>
    %c0_13 = arith.constant 0 : index
    %c0_14 = arith.constant 0 : index
    %21 = vector.load %arg7[%c0_13, %c0_14] : memref<16x16xf32, #tpu.memory_space<vmem>>, vector<16x16xf32>
    %cst_15 = arith.constant dense<0.000000e+00> : vector<16x16xf32>
    %22 = tpu.matmul %18, %19, %cst_15 {dimension_numbers = #tpu.dot_dimension_numbers<[1], [0], [0], [1], [0, 0, 1, 1], [], []>} : vector<16x16xf32>, vector<16x16xf32>, vector<16x16xf32> -> vector<16x16xf32>
    %23 = arith.mulf %22, %21 : vector<16x16xf32>
    %cst_16 = arith.constant dense<0.000000e+00> : vector<16xf32>
    %24 = vector.multi_reduction <add>, %23, %cst_16 [0] : vector<16x16xf32> to vector<16xf32>
    %25 = vector.shape_cast %24 : vector<16xf32> to vector<1x16xf32>
    %cst_17 = arith.constant 0.000000e+00 : f32
    %26 = vector.broadcast %cst_17 : f32 to vector<1x16xf32>
    %27 = arith.cmpf one, %25, %26 : vector<1x16xf32>
    %cst_18 = arith.constant 1.000000e+00 : f32
    %28 = vector.broadcast %cst_18 : f32 to vector<1x16xf32>
    %29 = arith.select %27, %25, %28 : vector<1x16xi1>, vector<1x16xf32>
    %30 = tpu.reciprocal %29 {approx = true} : vector<1x16xf32> -> vector<1x16xf32>
    %31 = arith.mulf %29, %30 : vector<1x16xf32>
    %cst_19 = arith.constant 2.000000e+00 : f32
    %32 = vector.broadcast %cst_19 : f32 to vector<1x16xf32>
    %33 = arith.subf %32, %31 : vector<1x16xf32>
    %34 = arith.mulf %30, %33 : vector<1x16xf32>
    %cst_20 = arith.constant 0.000000e+00 : f32
    %35 = vector.broadcast %cst_20 : f32 to vector<1x16xf32>
    %36 = arith.select %27, %34, %35 : vector<1x16xi1>, vector<1x16xf32>
    %37 = vector.broadcast %36 : vector<1x16xf32> to vector<16x16xf32>
    %38 = arith.mulf %23, %37 : vector<16x16xf32>
    %cst_21 = arith.constant dense<0.000000e+00> : vector<16x16xf32>
    %39 = tpu.matmul %38, %20, %cst_21 {dimension_numbers = #tpu.dot_dimension_numbers<[1], [0], [0], [1], [0, 0, 1, 1], [], []>} : vector<16x16xf32>, vector<16x16xf32>, vector<16x16xf32> -> vector<16x16xf32>
    %40 = arith.mulf %39, %21 : vector<16x16xf32>
    %cst_22 = arith.constant dense<0.000000e+00> : vector<16xf32>
    %41 = vector.multi_reduction <add>, %40, %cst_22 [0] : vector<16x16xf32> to vector<16xf32>
    %42 = vector.shape_cast %41 : vector<16xf32> to vector<1x16xf32>
    %cst_23 = arith.constant 0.000000e+00 : f32
    %43 = vector.broadcast %cst_23 : f32 to vector<1x16xf32>
    %44 = arith.cmpf one, %42, %43 : vector<1x16xf32>
    %cst_24 = arith.constant 1.000000e+00 : f32
    %45 = vector.broadcast %cst_24 : f32 to vector<1x16xf32>
    %46 = arith.select %44, %42, %45 : vector<1x16xi1>, vector<1x16xf32>
    %47 = tpu.reciprocal %46 {approx = true} : vector<1x16xf32> -> vector<1x16xf32>
    %48 = arith.mulf %46, %47 : vector<1x16xf32>
    %cst_25 = arith.constant 2.000000e+00 : f32
    %49 = vector.broadcast %cst_25 : f32 to vector<1x16xf32>
    %50 = arith.subf %49, %48 : vector<1x16xf32>
    %51 = arith.mulf %47, %50 : vector<1x16xf32>
    %cst_26 = arith.constant 0.000000e+00 : f32
    %52 = vector.broadcast %cst_26 : f32 to vector<1x16xf32>
    %53 = arith.select %44, %51, %52 : vector<1x16xi1>, vector<1x16xf32>
    %54 = vector.broadcast %53 : vector<1x16xf32> to vector<16x16xf32>
    %55 = arith.mulf %40, %54 : vector<16x16xf32>
    %c0_27 = arith.constant 0 : index
    %c0_28 = arith.constant 0 : index
    %56 = vector.load %arg8[%c0_27, %c0_28] : memref<8x32xf32, #tpu.memory_space<vmem>>, vector<8x32xf32>
    %c0_29 = arith.constant 0 : index
    %c0_30 = arith.constant 0 : index
    %57 = vector.load %arg9[%c0_29, %c0_30] : memref<32x32xf32, #tpu.memory_space<vmem>>, vector<32x32xf32>
    %cst_31 = arith.constant dense<0.000000e+00> : vector<8x32xf32>
    %58 = tpu.matmul %56, %57, %cst_31 {dimension_numbers = #tpu.dot_dimension_numbers<[1], [0], [0], [1], [0, 0, 1, 1], [], []>} : vector<8x32xf32>, vector<32x32xf32>, vector<8x32xf32> -> vector<8x32xf32>
    %c0_32 = arith.constant 0 : index
    %c0_33 = arith.constant 0 : index
    %59 = vector.load %arg6[%c0_32, %c0_33] : memref<16x8xf32, #tpu.memory_space<vmem>>, vector<16x8xf32>
    %cst_34 = arith.constant dense<0.000000e+00> : vector<16x32xf32>
    %60 = tpu.matmul %59, %58, %cst_34 {dimension_numbers = #tpu.dot_dimension_numbers<[1], [0], [0], [1], [0, 0, 1, 1], [], []>} : vector<16x8xf32>, vector<8x32xf32>, vector<16x32xf32> -> vector<16x32xf32>
    %cst_35 = arith.constant dense<0.000000e+00> : vector<16x32xf32>
    %61 = tpu.matmul %55, %60, %cst_35 {dimension_numbers = #tpu.dot_dimension_numbers<[0], [0], [1], [1], [0, 1, 1, 1], [], []>} : vector<16x16xf32>, vector<16x32xf32>, vector<16x32xf32> -> vector<16x32xf32>
    %c0_36 = arith.constant 0 : index
    %c0_37 = arith.constant 0 : index
    %62 = vector.load %arg10[%c0_36, %c0_37] : memref<1x32xf32, #tpu.memory_space<vmem>>, vector<1x32xf32>
    %63 = vector.broadcast %62 : vector<1x32xf32> to vector<16x32xf32>
    %64 = arith.addf %61, %63 : vector<16x32xf32>
    %cst_38 = arith.constant 0.000000e+00 : f32
    %65 = vector.broadcast %cst_38 : f32 to vector<16x32xf32>
    %66 = arith.maximumf %64, %65 : vector<16x32xf32>
    %c0_39 = arith.constant 0 : index
    %c0_40 = arith.constant 0 : index
    %67 = vector.load %arg11[%c0_39, %c0_40] : memref<64x32xf32, #tpu.memory_space<vmem>>, vector<64x32xf32>
    %68 = vector.extract_strided_slice %66 {offsets = [0, 0], sizes = [8, 32], strides = [1, 1]} : vector<16x32xf32> to vector<8x32xf32>
    %69 = vector.extract_strided_slice %67 {offsets = [0, 0], sizes = [32, 32], strides = [1, 1]} : vector<64x32xf32> to vector<32x32xf32>
    %cst_41 = arith.constant dense<0.000000e+00> : vector<8x32xf32>
    %70 = tpu.matmul %68, %69, %cst_41 {dimension_numbers = #tpu.dot_dimension_numbers<[1], [0], [0], [1], [0, 0, 1, 1], [], []>} : vector<8x32xf32>, vector<32x32xf32>, vector<8x32xf32> -> vector<8x32xf32>
    %71 = vector.extract_strided_slice %66 {offsets = [8, 0], sizes = [8, 32], strides = [1, 1]} : vector<16x32xf32> to vector<8x32xf32>
    %72 = vector.extract_strided_slice %67 {offsets = [32, 0], sizes = [32, 32], strides = [1, 1]} : vector<64x32xf32> to vector<32x32xf32>
    %cst_42 = arith.constant dense<0.000000e+00> : vector<8x32xf32>
    %73 = tpu.matmul %71, %72, %cst_42 {dimension_numbers = #tpu.dot_dimension_numbers<[1], [0], [0], [1], [0, 0, 1, 1], [], []>} : vector<8x32xf32>, vector<32x32xf32>, vector<8x32xf32> -> vector<8x32xf32>
    %74 = arith.addf %70, %73 : vector<8x32xf32>
    %c0_43 = arith.constant 0 : index
    %c0_44 = arith.constant 0 : index
    %75 = vector.load %arg12[%c0_43, %c0_44] : memref<1x32xf32, #tpu.memory_space<vmem>>, vector<1x32xf32>
    %76 = vector.broadcast %75 : vector<1x32xf32> to vector<8x32xf32>
    %77 = arith.addf %74, %76 : vector<8x32xf32>
    %c0_45 = arith.constant 0 : index
    %c0_46 = arith.constant 0 : index
    %78 = vector.load %arg13[%c0_45, %c0_46] : memref<8x32xf32, #tpu.memory_space<vmem>>, vector<8x32xf32>
    tpu.vector_store %arg13[%c0_45, %c0_46], %77 {strides = array<i32>} : memref<8x32xf32, #tpu.memory_space<vmem>>, vector<8x32xf32>,
    return
  }
  func.func @transform_0(%arg0: i32) -> (i32, i32) {
    %c0_i32 = arith.constant 0 : i32
    %c0_i32_0 = arith.constant 0 : i32
    %c0_i32_1 = arith.constant 0 : i32
    return %c0_i32, %c0_i32_0 : i32, i32
  }
  func.func @transform_1(%arg0: i32) -> (i32, i32) {
    %c0_i32 = arith.constant 0 : i32
    %c0_i32_0 = arith.constant 0 : i32
    %c0_i32_1 = arith.constant 0 : i32
    return %c0_i32, %c0_i32_0 : i32, i32
  }
  func.func @transform_2(%arg0: i32) -> (i32, i32) {
    %c0_i32 = arith.constant 0 : i32
    %c0_i32_0 = arith.constant 0 : i32
    %c0_i32_1 = arith.constant 0 : i32
    return %c0_i32, %c0_i32_0 : i32, i32
  }
  func.func @transform_3(%arg0: i32) -> (i32, i32) {
    %c0_i32 = arith.constant 0 : i32
    %c0_i32_0 = arith.constant 0 : i32
    %c0_i32_1 = arith.constant 0 : i32
    return %c0_i32, %c0_i32_0 : i32, i32
  }
  func.func @transform_4(%arg0: i32) -> (i32, i32) {
    %c0_i32 = arith.constant 0 : i32
    %c0_i32_0 = arith.constant 0 : i32
    %c0_i32_1 = arith.constant 0 : i32
    return %c0_i32, %c0_i32_0 : i32, i32
  }
  func.func @transform_5(%arg0: i32) -> (i32, i32) {
    %c0_i32 = arith.constant 0 : i32
    %c0_i32_0 = arith.constant 0 : i32
    %c0_i32_1 = arith.constant 0 : i32
    return %c0_i32, %c0_i32_0 : i32, i32
  }
  func.func @transform_6(%arg0: i32) -> (i32, i32) {
    %c0_i32 = arith.constant 0 : i32
    %c0_i32_0 = arith.constant 0 : i32
    %c0_i32_1 = arith.constant 0 : i32
    return %c0_i32, %c0_i32_0 : i32, i32
  }
  func.func @transform_7(%arg0: i32) -> (i32, i32) {
    %c0_i32 = arith.constant 0 : i32
    %c0_i32_0 = arith.constant 0 : i32
    return %arg0, %c0_i32 : i32, i32
  }
  func.func @transform_8(%arg0: i32) -> (i32, i32) {
    %c0_i32 = arith.constant 0 : i32
    %c0_i32_0 = arith.constant 0 : i32
    %c0_i32_1 = arith.constant 0 : i32
    return %c0_i32, %c0_i32_0 : i32, i32
  }
  func.func @transform_9(%arg0: i32) -> (i32, i32) {
    %c0_i32 = arith.constant 0 : i32
    %c0_i32_0 = arith.constant 0 : i32
    %c0_i32_1 = arith.constant 0 : i32
    return %c0_i32, %c0_i32_0 : i32, i32
  }
  func.func @transform_10(%arg0: i32) -> (i32, i32) {
    %c0_i32 = arith.constant 0 : i32
    %c0_i32_0 = arith.constant 0 : i32
    %c0_i32_1 = arith.constant 0 : i32
    return %c0_i32, %c0_i32_0 : i32, i32
  }
  func.func @transform_11(%arg0: i32) -> (i32, i32) {
    %c0_i32 = arith.constant 0 : i32
    %c0_i32_0 = arith.constant 0 : i32
    %c0_i32_1 = arith.constant 0 : i32
    return %c0_i32, %c0_i32_0 : i32, i32
  }
  func.func @transform_12(%arg0: i32) -> (i32, i32) {
    %c0_i32 = arith.constant 0 : i32
    %c0_i32_0 = arith.constant 0 : i32
    return %arg0, %c0_i32 : i32, i32
  }
}

</mosaic_0001>

<llo_original>
// kernel: tpu_custom_call.1
$region0: #{tpu_custom_call.1}
  #allocation0 [shape = 'u32[]', space=smem, size = 0x4, offset = 0x4, fixed_abs, tag = 'smem constant byte address 0x4 - core index']
  #allocation1 [shape = 'u32[72,128]{1,0:T(1,128)}', space=vmem, size = 0x9000, scoped, tag = 'internal scratch']
  %s0 = inlined_call_operand.vmem [shape: f32[6,8], index: 0, kind: input, shape index: {}]
  %s1 = inlined_call_operand.vmem [shape: f32[48,6], index: 1, kind: input, shape index: {}]
  %s2 = inlined_call_operand.vmem [shape: f32[8,128], index: 2, kind: input, shape index: {}]
  %s3 = inlined_call_operand.vmem [shape: f32[48,128], index: 3, kind: input, shape index: {}]
  %s4 = inlined_call_operand.vmem [shape: f32[128,16], index: 4, kind: input, shape index: {}]
  %s5 = inlined_call_operand.vmem [shape: f32[16,8], index: 5, kind: input, shape index: {}]
  %s6 = inlined_call_operand.vmem [shape: f32[16,16], index: 6, kind: input, shape index: {}]
  %s7 = inlined_call_operand.vmem [shape: f32[32,32], index: 7, kind: input, shape index: {}]
  %s8 = inlined_call_operand.vmem [shape: f32[32,32], index: 8, kind: input, shape index: {}]
  %s9 = inlined_call_operand.vmem [shape: f32[1,32], index: 9, kind: input, shape index: {}]
  %s10 = inlined_call_operand.vmem [shape: f32[64,32], index: 10, kind: input, shape index: {}]
  %s11 = inlined_call_operand.vmem [shape: f32[1,32], index: 11, kind: input, shape index: {}]
  %s12 = inlined_call_operand.hbm [shape: f32[32,32], index: 12, kind: output, shape index: {}]
  %s13 = sld [smem:[#allocation0]]
  $region81: #{tpu_custom_call.1} parent=0
    _
  %s15 = ssub.s32 1, %s13
  %s16 = scalar_select 0, %s15, %s13
  $region1: #{tpu_custom_call.1} parent=0
    #allocation2 [shape = 'u8[8192]{0}', space=vmem, size = 0x2000, scoped, tag = 'output window, operand 0']
    #allocation3 [shape = 's32[2]{0}', space=sflag, size = 0x8, scoped, tag = 'scoped memory for tpu_custom_call.1']
    %17 = vsyncpa [#allocation3], 0
    %s18 = scalar_lea.sflag [#allocation3], 1
    %19 = vsyncpa %s18, 0
    loop: start=0, step=1, limit=6
    $region2: #{tpu_custom_call.1} parent=1 // loop_pre_header
      _
    $region3: #{tpu_custom_call.1} parent=1 // loop_header
      %s21 = sphi 0, %s25
      %p22 = scmp.ge.s32.totalorder %s21, 6
      %s29 = sphi 0, %s29
      %s31 = sphi 0, %s29
      %s32 = sphi 0, %s31
      %s46 = sphi 0, %s32
      %s50 = sphi 0, %s50
      %s52 = sphi 0, %s50
      %s53 = sphi 0, %s52
      %s67 = sphi 0, %s53
      %s71 = sphi 0, %s71
      %s73 = sphi 0, %s71
      %s74 = sphi 0, %s73
      %s88 = sphi 0, %s74
      %s92 = sphi 0, %s92
      %s94 = sphi 0, %s92
      %s95 = sphi 0, %s94
      %s109 = sphi 0, %s95
      %s113 = sphi 0, %s113
      %s115 = sphi 0, %s113
      %s116 = sphi 0, %s115
      %s130 = sphi 0, %s116
      %s134 = sphi 0, %s134
      %s136 = sphi 0, %s134
      %s137 = sphi 0, %s136
      %s151 = sphi 0, %s137
      %s155 = sphi 0, %s155
      %s157 = sphi 0, %s155
      %s158 = sphi 0, %s157
      %s172 = sphi 0, %s158
      %s178 = sphi 0, %s180
      %s181 = sphi 0, %s178
      %s182 = sphi 0, %s181
      %s198 = sphi 0, %s182
      %s202 = sphi 0, %s202
      %s204 = sphi 0, %s202
      %s205 = sphi 0, %s204
      %s219 = sphi 0, %s205
      %s223 = sphi 0, %s223
      %s225 = sphi 0, %s223
      %s226 = sphi 0, %s225
      %s240 = sphi 0, %s226
      %s244 = sphi 0, %s244
      %s246 = sphi 0, %s244
      %s247 = sphi 0, %s246
      %s261 = sphi 0, %s247
      %s265 = sphi 0, %s265
      %s267 = sphi 0, %s265
      %s268 = sphi 0, %s267
      %s282 = sphi 0, %s268
      %s288 = sphi 0, %s290
      %s291 = sphi 0, %s288
      %s292 = sphi 0, %s291
      %s308 = sphi 0, %s292
    $region4: #{tpu_custom_call.1} parent=1 // loop_header_branch
      %24 = sbr.rel (%p22) target = $region8
    $region5: #{tpu_custom_call.1} parent=1 // loop_body
      %s26 = ssub.s32 %s21, 1
      %s27 = ssub.s32 %s21, 2
      %s28 = sadd.s32 %s21, 1
      %s30 = sadd.s32 %s29, 1
      %p33 = scmp.eq.s32.totalorder %s21, 3
      %p34 = scmp.ne.s32.totalorder %s29, %s31
      %p35 = scmp.eq.s32.totalorder %s21, 0
      %p36 = por %p34, %p35
      %p37 = scmp.ne.s32.totalorder %s29, %s31
      %p38 = scmp.eq.s32.totalorder %s26, 3
      %p39 = por %p37, %p38
      %p40 = scmp.ne.s32.totalorder %s31, %s32
      %p41 = scmp.eq.s32.totalorder %s26, 0
      %p42 = por %p40, %p41
      %p43 = scmp.ne.s32.totalorder %s31, %s32
      %p44 = scmp.eq.s32.totalorder %s27, 3
      %p45 = por %p43, %p44
      %p47 = scmp.ne.s32.totalorder %s32, %s46
      %p48 = scmp.eq.s32.totalorder %s27, 0
      %p49 = por %p47, %p48
      %s51 = sadd.s32 %s50, 1
      %p54 = scmp.eq.s32.totalorder %s21, 3
      %p55 = scmp.ne.s32.totalorder %s50, %s52
      %p56 = scmp.eq.s32.totalorder %s21, 0
      %p57 = por %p55, %p56
      %p58 = scmp.ne.s32.totalorder %s50, %s52
      %p59 = scmp.eq.s32.totalorder %s26, 3
      %p60 = por %p58, %p59
      %p61 = scmp.ne.s32.totalorder %s52, %s53
      %p62 = scmp.eq.s32.totalorder %s26, 0
      %p63 = por %p61, %p62
      %p64 = scmp.ne.s32.totalorder %s52, %s53
      %p65 = scmp.eq.s32.totalorder %s27, 3
      %p66 = por %p64, %p65
      %p68 = scmp.ne.s32.totalorder %s53, %s67
      %p69 = scmp.eq.s32.totalorder %s27, 0
      %p70 = por %p68, %p69
      %s72 = sadd.s32 %s71, 1
      %p75 = scmp.eq.s32.totalorder %s21, 3
      %p76 = scmp.ne.s32.totalorder %s71, %s73
      %p77 = scmp.eq.s32.totalorder %s21, 0
      %p78 = por %p76, %p77
      %p79 = scmp.ne.s32.totalorder %s71, %s73
      %p80 = scmp.eq.s32.totalorder %s26, 3
      %p81 = por %p79, %p80
      %p82 = scmp.ne.s32.totalorder %s73, %s74
      %p83 = scmp.eq.s32.totalorder %s26, 0
      %p84 = por %p82, %p83
      %p85 = scmp.ne.s32.totalorder %s73, %s74
      %p86 = scmp.eq.s32.totalorder %s27, 3
      %p87 = por %p85, %p86
      %p89 = scmp.ne.s32.totalorder %s74, %s88
      %p90 = scmp.eq.s32.totalorder %s27, 0
      %p91 = por %p89, %p90
      %s93 = sadd.s32 %s92, 1
      %p96 = scmp.eq.s32.totalorder %s21, 3
      %p97 = scmp.ne.s32.totalorder %s92, %s94
      %p98 = scmp.eq.s32.totalorder %s21, 0
      %p99 = por %p97, %p98
      %p100 = scmp.ne.s32.totalorder %s92, %s94
      %p101 = scmp.eq.s32.totalorder %s26, 3
      %p102 = por %p100, %p101
      %p103 = scmp.ne.s32.totalorder %s94, %s95
      %p104 = scmp.eq.s32.totalorder %s26, 0
      %p105 = por %p103, %p104
      %p106 = scmp.ne.s32.totalorder %s94, %s95
      %p107 = scmp.eq.s32.totalorder %s27, 3
      %p108 = por %p106, %p107
      %p110 = scmp.ne.s32.totalorder %s95, %s109
      %p111 = scmp.eq.s32.totalorder %s27, 0
      %p112 = por %p110, %p111
      %s114 = sadd.s32 %s113, 1
      %p117 = scmp.eq.s32.totalorder %s21, 3
      %p118 = scmp.ne.s32.totalorder %s113, %s115
      %p119 = scmp.eq.s32.totalorder %s21, 0
      %p120 = por %p118, %p119
      %p121 = scmp.ne.s32.totalorder %s113, %s115
      %p122 = scmp.eq.s32.totalorder %s26, 3
      %p123 = por %p121, %p122
      %p124 = scmp.ne.s32.totalorder %s115, %s116
      %p125 = scmp.eq.s32.totalorder %s26, 0
      %p126 = por %p124, %p125
      %p127 = scmp.ne.s32.totalorder %s115, %s116
      %p128 = scmp.eq.s32.totalorder %s27, 3
      %p129 = por %p127, %p128
      %p131 = scmp.ne.s32.totalorder %s116, %s130
      %p132 = scmp.eq.s32.totalorder %s27, 0
      %p133 = por %p131, %p132
      %s135 = sadd.s32 %s134, 1
      %p138 = scmp.eq.s32.totalorder %s21, 3
      %p139 = scmp.ne.s32.totalorder %s134, %s136
      %p140 = scmp.eq.s32.totalorder %s21, 0
      %p141 = por %p139, %p140
      %p142 = scmp.ne.s32.totalorder %s134, %s136
      %p143 = scmp.eq.s32.totalorder %s26, 3
      %p144 = por %p142, %p143
      %p145 = scmp.ne.s32.totalorder %s136, %s137
      %p146 = scmp.eq.s32.totalorder %s26, 0
      %p147 = por %p145, %p146
      %p148 = scmp.ne.s32.totalorder %s136, %s137
      %p149 = scmp.eq.s32.totalorder %s27, 3
      %p150 = por %p148, %p149
      %p152 = scmp.ne.s32.totalorder %s137, %s151
      %p153 = scmp.eq.s32.totalorder %s27, 0
      %p154 = por %p152, %p153
      %s156 = sadd.s32 %s155, 1
      %p159 = scmp.eq.s32.totalorder %s21, 3
      %p160 = scmp.ne.s32.totalorder %s155, %s157
      %p161 = scmp.eq.s32.totalorder %s21, 0
      %p162 = por %p160, %p161
      %p163 = scmp.ne.s32.totalorder %s155, %s157
      %p164 = scmp.eq.s32.totalorder %s26, 3
      %p165 = por %p163, %p164
      %p166 = scmp.ne.s32.totalorder %s157, %s158
      %p167 = scmp.eq.s32.totalorder %s26, 0
      %p168 = por %p166, %p167
      %p169 = scmp.ne.s32.totalorder %s157, %s158
      %p170 = scmp.eq.s32.totalorder %s27, 3
      %p171 = por %p169, %p170
      %p173 = scmp.ne.s32.totalorder %s158, %s172
      %p174 = scmp.eq.s32.totalorder %s27, 0
      %p175 = por %p173, %p174
      %s176 = ssub.s32 %s21, %s28
      %p177 = scmp.eq.s32.totalorder %s176, 0
      %s179 = sadd.s32 %s178, 1
      %s180 = scalar_select %p177, %s178, %s179
      %p183 = pneg %p177
      %p184 = scmp.eq.s32.totalorder %s21, 3
      %p185 = por %p183, %p184
      %p186 = scmp.ne.s32.totalorder %s178, %s181
      %p187 = scmp.eq.s32.totalorder %s21, 0
      %p188 = por %p186, %p187
      %p189 = scmp.ne.s32.totalorder %s178, %s181
      %p190 = scmp.eq.s32.totalorder %s26, 3
      %p191 = por %p189, %p190
      %p192 = scmp.ne.s32.totalorder %s181, %s182
      %p193 = scmp.eq.s32.totalorder %s26, 0
      %p194 = por %p192, %p193
      %p195 = scmp.ne.s32.totalorder %s181, %s182
      %p196 = scmp.eq.s32.totalorder %s27, 3
      %p197 = por %p195, %p196
      %p199 = scmp.ne.s32.totalorder %s182, %s198
      %p200 = scmp.eq.s32.totalorder %s27, 0
      %p201 = por %p199, %p200
      %s203 = sadd.s32 %s202, 1
      %p206 = scmp.eq.s32.totalorder %s21, 3
      %p207 = scmp.ne.s32.totalorder %s202, %s204
      %p208 = scmp.eq.s32.totalorder %s21, 0
      %p209 = por %p207, %p208
      %p210 = scmp.ne.s32.totalorder %s202, %s204
      %p211 = scmp.eq.s32.totalorder %s26, 3
      %p212 = por %p210, %p211
      %p213 = scmp.ne.s32.totalorder %s204, %s205
      %p214 = scmp.eq.s32.totalorder %s26, 0
      %p215 = por %p213, %p214
      %p216 = scmp.ne.s32.totalorder %s204, %s205
      %p217 = scmp.eq.s32.totalorder %s27, 3
      %p218 = por %p216, %p217
      %p220 = scmp.ne.s32.totalorder %s205, %s219
      %p221 = scmp.eq.s32.totalorder %s27, 0
      %p222 = por %p220, %p221
      %s224 = sadd.s32 %s223, 1
      %p227 = scmp.eq.s32.totalorder %s21, 3
      %p228 = scmp.ne.s32.totalorder %s223, %s225
      %p229 = scmp.eq.s32.totalorder %s21, 0
      %p230 = por %p228, %p229
      %p231 = scmp.ne.s32.totalorder %s223, %s225
      %p232 = scmp.eq.s32.totalorder %s26, 3
      %p233 = por %p231, %p232
      %p234 = scmp.ne.s32.totalorder %s225, %s226
      %p235 = scmp.eq.s32.totalorder %s26, 0
      %p236 = por %p234, %p235
      %p237 = scmp.ne.s32.totalorder %s225, %s226
      %p238 = scmp.eq.s32.totalorder %s27, 3
      %p239 = por %p237, %p238
      %p241 = scmp.ne.s32.totalorder %s226, %s240
      %p242 = scmp.eq.s32.totalorder %s27, 0
      %p243 = por %p241, %p242
      %s245 = sadd.s32 %s244, 1
      %p248 = scmp.eq.s32.totalorder %s21, 3
      %p249 = scmp.ne.s32.totalorder %s244, %s246
      %p250 = scmp.eq.s32.totalorder %s21, 0
      %p251 = por %p249, %p250
      %p252 = scmp.ne.s32.totalorder %s244, %s246
      %p253 = scmp.eq.s32.totalorder %s26, 3
      %p254 = por %p252, %p253
      %p255 = scmp.ne.s32.totalorder %s246, %s247
      %p256 = scmp.eq.s32.totalorder %s26, 0
      %p257 = por %p255, %p256
      %p258 = scmp.ne.s32.totalorder %s246, %s247
      %p259 = scmp.eq.s32.totalorder %s27, 3
      %p260 = por %p258, %p259
      %p262 = scmp.ne.s32.totalorder %s247, %s261
      %p263 = scmp.eq.s32.totalorder %s27, 0
      %p264 = por %p262, %p263
      %s266 = sadd.s32 %s265, 1
      %p269 = scmp.eq.s32.totalorder %s21, 3
      %p270 = scmp.ne.s32.totalorder %s265, %s267
      %p271 = scmp.eq.s32.totalorder %s21, 0
      %p272 = por %p270, %p271
      %p273 = scmp.ne.s32.totalorder %s265, %s267
      %p274 = scmp.eq.s32.totalorder %s26, 3
      %p275 = por %p273, %p274
      %p276 = scmp.ne.s32.totalorder %s267, %s268
      %p277 = scmp.eq.s32.totalorder %s26, 0
      %p278 = por %p276, %p277
      %p279 = scmp.ne.s32.totalorder %s267, %s268
      %p280 = scmp.eq.s32.totalorder %s27, 3
      %p281 = por %p279, %p280
      %p283 = scmp.ne.s32.totalorder %s268, %s282
      %p284 = scmp.eq.s32.totalorder %s27, 0
      %p285 = por %p283, %p284
      %s286 = ssub.s32 %s21, %s28
      %p287 = scmp.eq.s32.totalorder %s286, 0
      %s289 = sadd.s32 %s288, 1
      %s290 = scalar_select %p287, %s288, %s289
      %p293 = pneg %p287
      %p294 = scmp.eq.s32.totalorder %s21, 3
      %p295 = por %p293, %p294
      %p296 = scmp.ne.s32.totalorder %s288, %s291
      %p297 = scmp.eq.s32.totalorder %s21, 0
      %p298 = por %p296, %p297
      %p299 = scmp.ne.s32.totalorder %s288, %s291
      %p300 = scmp.eq.s32.totalorder %s26, 3
      %p301 = por %p299, %p300
      %p302 = scmp.ne.s32.totalorder %s291, %s292
      %p303 = scmp.eq.s32.totalorder %s26, 0
      %p304 = por %p302, %p303
      %p305 = scmp.ne.s32.totalorder %s291, %s292
      %p306 = scmp.eq.s32.totalorder %s27, 3
      %p307 = por %p305, %p306
      %p309 = scmp.ne.s32.totalorder %s292, %s308
      %p310 = scmp.eq.s32.totalorder %s27, 0
      %p311 = por %p309, %p310
      %p312 = scmp.le.s32.totalorder 1, %s21
      %p313 = scmp.lt.s32.totalorder %s21, 5
      %p314 = pnand %p312, %p313
      %p315 = pneg %p314
      // Predicated region
      $region9: #{tpu_custom_call.1} parent=5 // pred_check
        _
      $region10: #{tpu_custom_call.1} parent=5 // pred_check_branch
        %317 = sbr.rel (%p314) target = $region12
      $region11: #{tpu_custom_call.1} parent=5 // pred_region
        %s318 = ssub.s32 %s21, 1
        // Predicated region
        $region13: #{tpu_custom_call.1} parent=11 // pred_check
          %p319 = pneg %p42
        $region14: #{tpu_custom_call.1} parent=11 // pred_check_branch
          %321 = sbr.rel (%p319) target = $region16
        $region15: #{tpu_custom_call.1} parent=11 // pred_region
          _
        $region16: #{tpu_custom_call.1} parent=11 // pred_fallthru
          _
        // Predicated region
        $region17: #{tpu_custom_call.1} parent=11 // pred_check
          %p322 = pneg %p63
        $region18: #{tpu_custom_call.1} parent=11 // pred_check_branch
          %324 = sbr.rel (%p322) target = $region20
        $region19: #{tpu_custom_call.1} parent=11 // pred_region
          _
        $region20: #{tpu_custom_call.1} parent=11 // pred_fallthru
          _
        // Predicated region
        $region21: #{tpu_custom_call.1} parent=11 // pred_check
          %p325 = pneg %p84
        $region22: #{tpu_custom_call.1} parent=11 // pred_check_branch
          %327 = sbr.rel (%p325) target = $region24
        $region23: #{tpu_custom_call.1} parent=11 // pred_region
          _
        $region24: #{tpu_custom_call.1} parent=11 // pred_fallthru
          _
        // Predicated region
        $region25: #{tpu_custom_call.1} parent=11 // pred_check
          %p328 = pneg %p105
        $region26: #{tpu_custom_call.1} parent=11 // pred_check_branch
          %330 = sbr.rel (%p328) target = $region28
        $region27: #{tpu_custom_call.1} parent=11 // pred_region
          _
        $region28: #{tpu_custom_call.1} parent=11 // pred_fallthru
          _
        // Predicated region
        $region29: #{tpu_custom_call.1} parent=11 // pred_check
          %p331 = pneg %p126
        $region30: #{tpu_custom_call.1} parent=11 // pred_check_branch
          %333 = sbr.rel (%p331) target = $region32
        $region31: #{tpu_custom_call.1} parent=11 // pred_region
          _
        $region32: #{tpu_custom_call.1} parent=11 // pred_fallthru
          _
        // Predicated region
        $region33: #{tpu_custom_call.1} parent=11 // pred_check
          %p334 = pneg %p147
        $region34: #{tpu_custom_call.1} parent=11 // pred_check_branch
          %336 = sbr.rel (%p334) target = $region36
        $region35: #{tpu_custom_call.1} parent=11 // pred_region
          _
        $region36: #{tpu_custom_call.1} parent=11 // pred_fallthru
          _
        // Predicated region
        $region37: #{tpu_custom_call.1} parent=11 // pred_check
          %p337 = pneg %p168
        $region38: #{tpu_custom_call.1} parent=11 // pred_check_branch
          %339 = sbr.rel (%p337) target = $region40
        $region39: #{tpu_custom_call.1} parent=11 // pred_region
          _
        $region40: #{tpu_custom_call.1} parent=11 // pred_fallthru
          _
        // Predicated region
        $region41: #{tpu_custom_call.1} parent=11 // pred_check
          %p340 = pneg %p215
        $region42: #{tpu_custom_call.1} parent=11 // pred_check_branch
          %342 = sbr.rel (%p340) target = $region44
        $region43: #{tpu_custom_call.1} parent=11 // pred_region
          _
        $region44: #{tpu_custom_call.1} parent=11 // pred_fallthru
          _
        // Predicated region
        $region45: #{tpu_custom_call.1} parent=11 // pred_check
          %p343 = pneg %p236
        $region46: #{tpu_custom_call.1} parent=11 // pred_check_branch
          %345 = sbr.rel (%p343) target = $region48
        $region47: #{tpu_custom_call.1} parent=11 // pred_region
          _
        $region48: #{tpu_custom_call.1} parent=11 // pred_fallthru
          _
        // Predicated region
        $region49: #{tpu_custom_call.1} parent=11 // pred_check
          %p346 = pneg %p257
        $region50: #{tpu_custom_call.1} parent=11 // pred_check_branch
          %348 = sbr.rel (%p346) target = $region52
        $region51: #{tpu_custom_call.1} parent=11 // pred_region
          _
        $region52: #{tpu_custom_call.1} parent=11 // pred_fallthru
          _
        // Predicated region
        $region53: #{tpu_custom_call.1} parent=11 // pred_check
          %p349 = pneg %p278
        $region54: #{tpu_custom_call.1} parent=11 // pred_check_branch
          %351 = sbr.rel (%p349) target = $region56
        $region55: #{tpu_custom_call.1} parent=11 // pred_region
          _
        $region56: #{tpu_custom_call.1} parent=11 // pred_fallthru
          _
      $region12: #{tpu_custom_call.1} parent=5 // pred_fallthru
        _
      %p352 = scmp.lt.s32.totalorder %s21, 4
      // Predicated region
      $region57: #{tpu_custom_call.1} parent=5 // pred_check
        %p353 = pneg %p352
      $region58: #{tpu_custom_call.1} parent=5 // pred_check_branch
        %355 = sbr.rel (%p353) target = $region60
      $region59: #{tpu_custom_call.1} parent=5 // pred_region
        // Predicated region
        $region61: #{tpu_custom_call.1} parent=59 // pred_check
          %p356 = pneg %p188
        $region62: #{tpu_custom_call.1} parent=59 // pred_check_branch
          %358 = sbr.rel (%p356) target = $region64
        $region63: #{tpu_custom_call.1} parent=59 // pred_region
          %p359 = scmp.lt.s32.totalorder %s21, 3
          %s360 = scalar_select %p359, %s21, 3
          %s361 = smul.addr %s360, 8
          %s362 = scalar_lea.vmem %s7, %s361
        $region64: #{tpu_custom_call.1} parent=59 // pred_fallthru
          _
      $region60: #{tpu_custom_call.1} parent=5 // pred_fallthru
        _
      %p363 = scmp.le.s32.totalorder 1, %s21
      %p364 = scmp.lt.s32.totalorder %s21, 5
      %p365 = pnand %p363, %p364
      %p366 = pneg %p365
      // Predicated region
      $region65: #{tpu_custom_call.1} parent=5 // pred_check
        _
      $region66: #{tpu_custom_call.1} parent=5 // pred_check_branch
        %368 = sbr.rel (%p365) target = $region68
      $region67: #{tpu_custom_call.1} parent=5 // pred_region
        %s369 = ssub.s32 %s21, 1
        %p370 = pneg %p42
        %p371 = pneg %p39
        %p372 = pneg %p63
        %p373 = pneg %p60
        %p374 = pneg %p84
        %p375 = pneg %p81
        %p376 = pneg %p105
        %p377 = pneg %p102
        %p378 = pneg %p126
        %p379 = pneg %p123
        %p380 = pneg %p147
        %p381 = pneg %p144
        %p382 = pneg %p168
        %p383 = pneg %p165
        %p384 = scmp.lt.s32.totalorder %s26, 3
        %s385 = scalar_select %p384, %s26, 3
        %s386 = smul.addr %s385, 8
        %s387 = scalar_lea.vmem %s7, %s386
        %p388 = pneg %p194
        %p389 = pneg %p191
        %p390 = pneg %p215
        %p391 = pneg %p212
        %p392 = pneg %p236
        %p393 = pneg %p233
        %p394 = pneg %p257
        %p395 = pneg %p254
        %p396 = pneg %p278
        %p397 = pneg %p275
        %p398 = pneg %p304
        %p399 = pneg %p301
        %s400 = sand.u32 %s291, 1
        %s401 = scalar_lea.sflag [#allocation3], %s400
        %s402 = sand.u32 %s291, 1
        %s403 = smul.addr %s402, 8
        %s404 = scalar_lea.vmem [#allocation2], %s403
        %p405 = scmp.lt.s32.totalorder %s26, 3
        %s406 = scalar_select %p405, %s26, 3
        %s407 = smul.addr %s406, 8
        %s408 = scalar_lea.vmem %s7, %s407
        %v409 = vld [vmem:[%s0] sm:$0x3f]
        %vm410 = vcmask 62464
        %v411 = vsel %vm410, %v409, -inf
        %412 = vmax.xlane.f32.xlu0 %v411
        %v413 = vpop.xlane.xlu0 %412
        %v414 = vsub.f32 %v409, %v413
        %v415 = vmul.f32 %v414, 1.442695
        %v416 = vpow.pop %v415
        %v417 = vsel %vm410, %v416, 0.0
        %418 = vadd.xlane.f32.xlu0 %v417
        %v419 = vpop.xlane.xlu0 %418
        %v420 = vrcp.pop %v419
        %v421 = vmul.f32 %v419, %v420
        %v422 = vsub.f32 1.0, %v421
        %v423 = vmul.f32 %v420, %v422
        %v424 = vadd.f32 %v420, %v423
        %vm425 = vweird.f32 %v419
        %vm426 = vweird.f32 %v420
        %vm427 = vmor %vm425, %vm426
        %v428 = vsel %vm427, %v420, %v424
        %v429 = vand.u32 2147483647, %v419
        %vm430 = vcmp.eq.f32.partialorder %v429, 8.507059e+37
        %v431 = vand.u32 %v419, 2147483648
        %v432 = vor.u32 1.1754944e-38, %v431
        %v433 = vsel %vm430, %v432, %v428
        %v434 = vmul.f32 %v416, %v433
        %v435 = vld [vmem:[%s1] sm:$0xff]
        %v436 = vld [vmem:[%s1 + $0x8] sm:$0xff]
        %v437 = vld [vmem:[%s1 + $0x10] sm:$0xff]
        %v438 = vld [vmem:[%s1 + $0x18] sm:$0xff]
        %v439 = vld [vmem:[%s1 + $0x20] sm:$0xff]
        %v440 = vld [vmem:[%s1 + $0x28] sm:$0xff]
        %vm441 = vcmask 48128
        %v443 = vsel %vm441, %v435, 0
        %v446 = vsel %vm441, %v436, 0
        %v449 = vsel %vm441, %v437, 0
        %v452 = vsel %vm441, %v438, 0
        %v455 = vsel %vm441, %v439, 0
        %v458 = vsel %vm441, %v440, 0
        %vm460 = vcmask 1045504
        %v462 = vsel %vm460, %v434, 0
        %464 = vmatpush.msra.mxu0 0.0
        %465 = vmatpush.msra.mxu0 0.0
        %466 = vmatpush.msra.mxu0 0.0
        %467 = vmatpush.msra.mxu0 0.0
        %468 = vmatpush.msra.mxu0 0.0
        %469 = vmatpush.msra.mxu0 0.0
        %470 = vmatpush.msra.mxu0 0.0
        %471 = vmatpush.msra.mxu0 0.0
        %472 = vmatpush.msra.mxu0 0.0
        %473 = vmatpush.msra.mxu0 0.0
        %474 = vmatpush.msra.mxu0 0.0
        %475 = vmatpush.msra.mxu0 0.0
        %476 = vmatpush.msra.mxu0 0.0
        %477 = vmatpush.msra.mxu0 0.0
        %478 = vmatpush.msra.mxu0 0.0
        %479 = vmatpush.msra.mxu0 %v462
        %480 = vmatmul.f32.gmra.mxu0 %v443
        %v481 = vpop.f32.mrf.mxu0
        %v482 = vadd.f32 0.0, %v481
        %483 = vmatmul.f32.gmra.mxu0 %v446
        %v484 = vpop.f32.mrf.mxu0
        %v485 = vadd.f32 0.0, %v484
        %486 = vmatmul.f32.gmra.mxu0 %v449
        %v487 = vpop.f32.mrf.mxu0
        %v488 = vadd.f32 0.0, %v487
        %489 = vmatmul.f32.gmra.mxu0 %v452
        %v490 = vpop.f32.mrf.mxu0
        %v491 = vadd.f32 0.0, %v490
        %492 = vmatmul.f32.gmra.mxu0 %v455
        %v493 = vpop.f32.mrf.mxu0
        %v494 = vadd.f32 0.0, %v493
        %495 = vmatmul.f32.gmra.mxu0 %v458
        %v496 = vpop.f32.mrf.mxu0
        %v497 = vadd.f32 0.0, %v496
        %498 = vdwg.mxu0
        %v499 = vld [vmem:[%s2] sm:$0xff]
        %vm500 = vcmask 64512
        %v502 = vsel %vm500, %v482, 0
        %v505 = vsel %vm500, %v485, 0
        %v508 = vsel %vm500, %v488, 0
        %v511 = vsel %vm500, %v491, 0
        %v514 = vsel %vm500, %v494, 0
        %v517 = vsel %vm500, %v497, 0
        %519 = vmatpush.msra.mxu0 0.0
        %520 = vmatpush.msra.mxu0 0.0
        %521 = vmatpush.msra.mxu0 0.0
        %522 = vmatpush.msra.mxu0 0.0
        %523 = vmatpush.msra.mxu0 0.0
        %524 = vmatpush.msra.mxu0 0.0
        %525 = vmatpush.msra.mxu0 0.0
        %526 = vmatpush.msra.mxu0 0.0
        %527 = vmatpush.msra.mxu0 0.0
        %528 = vmatpush.msra.mxu0 0.0
        %529 = vmatpush.msra.mxu0 0.0
        %530 = vmatpush.msra.mxu0 0.0
        %531 = vmatpush.msra.mxu0 0.0
        %532 = vmatpush.msra.mxu0 0.0
        %533 = vmatpush.msra.mxu0 0.0
        %534 = vmatpush.msra.mxu0 %v499
        %535 = vmatmul.f32.gmra.mxu0 %v502
        %v536 = vpop.f32.mrf.mxu0
        %v537 = vadd.f32 0.0, %v536
        %538 = vmatmul.f32.gmra.mxu0 %v505
        %v539 = vpop.f32.mrf.mxu0
        %v540 = vadd.f32 0.0, %v539
        %541 = vmatmul.f32.gmra.mxu0 %v508
        %v542 = vpop.f32.mrf.mxu0
        %v543 = vadd.f32 0.0, %v542
        %544 = vmatmul.f32.gmra.mxu0 %v511
        %v545 = vpop.f32.mrf.mxu0
        %v546 = vadd.f32 0.0, %v545
        %547 = vmatmul.f32.gmra.mxu0 %v514
        %v548 = vpop.f32.mrf.mxu0
        %v549 = vadd.f32 0.0, %v548
        %550 = vmatmul.f32.gmra.mxu0 %v517
        %v551 = vpop.f32.mrf.mxu0
        %v552 = vadd.f32 0.0, %v551
        %553 = vdwg.mxu0
        %v554 = vld [vmem:[%s3] sm:$0xff]
        %v555 = vld [vmem:[%s3 + $0x8] sm:$0xff]
        %v556 = vld [vmem:[%s3 + $0x10] sm:$0xff]
        %v557 = vld [vmem:[%s3 + $0x18] sm:$0xff]
        %v558 = vld [vmem:[%s3 + $0x20] sm:$0xff]
        %v559 = vld [vmem:[%s3 + $0x28] sm:$0xff]
        %v560 = vmul.f32 %v537, %v554
        %v561 = vmul.f32 %v540, %v555
        %v562 = vmul.f32 %v543, %v556
        %v563 = vmul.f32 %v546, %v557
        %v564 = vmul.f32 %v549, %v558
        %v565 = vmul.f32 %v552, %v559
        %v566 = vld [vmem:[%s4] sm:$0xff]
        %v567 = vld [vmem:[%s4 + $0x8] sm:$0xff]
        %v568 = vld [vmem:[%s4 + $0x10] sm:$0xff]
        %v569 = vld [vmem:[%s4 + $0x18] sm:$0xff]
        %v570 = vld [vmem:[%s4 + $0x20] sm:$0xff]
        %v571 = vld [vmem:[%s4 + $0x28] sm:$0xff]
        %v572 = vld [vmem:[%s4 + $0x30] sm:$0xff]
        %v573 = vld [vmem:[%s4 + $0x38] sm:$0xff]
        %v574 = vld [vmem:[%s4 + $0x40] sm:$0xff]
        %v575 = vld [vmem:[%s4 + $0x48] sm:$0xff]
        %v576 = vld [vmem:[%s4 + $0x50] sm:$0xff]
        %v577 = vld [vmem:[%s4 + $0x58] sm:$0xff]
        %v578 = vld [vmem:[%s4 + $0x60] sm:$0xff]
        %v579 = vld [vmem:[%s4 + $0x68] sm:$0xff]
        %v580 = vld [vmem:[%s4 + $0x70] sm:$0xff]
        %v581 = vld [vmem:[%s4 + $0x78] sm:$0xff]
        %582 = vmatpush.msra.mxu0 %v581
        %583 = vmatpush.msra.mxu0 %v580
        %584 = vmatpush.msra.mxu0 %v579
        %585 = vmatpush.msra.mxu0 %v578
        %586 = vmatpush.msra.mxu0 %v577
        %587 = vmatpush.msra.mxu0 %v576
        %588 = vmatpush.msra.mxu0 %v575
        %589 = vmatpush.msra.mxu0 %v574
        %590 = vmatpush.msra.mxu0 %v573
        %591 = vmatpush.msra.mxu0 %v572
        %592 = vmatpush.msra.mxu0 %v571
        %593 = vmatpush.msra.mxu0 %v570
        %594 = vmatpush.msra.mxu0 %v569
        %595 = vmatpush.msra.mxu0 %v568
        %596 = vmatpush.msra.mxu0 %v567
        %597 = vmatpush.msra.mxu0 %v566
        %598 = vmatmul.f32.gmra.mxu0 %v560
        %v599 = vpop.f32.mrf.mxu0
        %v600 = vadd.f32 0.0, %v599
        %601 = vmatmul.f32.gmra.mxu0 %v561
        %v602 = vpop.f32.mrf.mxu0
        %v603 = vadd.f32 0.0, %v602
        %604 = vmatmul.f32.gmra.mxu0 %v562
        %v605 = vpop.f32.mrf.mxu0
        %v606 = vadd.f32 0.0, %v605
        %607 = vmatmul.f32.gmra.mxu0 %v563
        %v608 = vpop.f32.mrf.mxu0
        %v609 = vadd.f32 0.0, %v608
        %610 = vmatmul.f32.gmra.mxu0 %v564
        %v611 = vpop.f32.mrf.mxu0
        %v612 = vadd.f32 0.0, %v611
        %613 = vmatmul.f32.gmra.mxu0 %v565
        %v614 = vpop.f32.mrf.mxu0
        %v615 = vadd.f32 0.0, %v614
        %616 = vdwg.mxu0
        %v617 = vld [vmem:[%s6] sm:$0xff]
        %v618 = vld [vmem:[%s6 + $0x8] sm:$0xff]
        %vm619 = vcmask 130048
        %v621 = vsel %vm619, %v600, 0
        %v624 = vsel %vm619, %v603, 0
        %626 = vmatpush.msra.mxu0 0.0
        %627 = vmatpush.msra.mxu0 0.0
        %628 = vmatpush.msra.mxu0 0.0
        %629 = vmatpush.msra.mxu0 0.0
        %630 = vmatpush.msra.mxu0 0.0
        %631 = vmatpush.msra.mxu0 0.0
        %632 = vmatpush.msra.mxu0 0.0
        %633 = vmatpush.msra.mxu0 0.0
        %634 = vmatpush.msra.mxu0 0.0
        %635 = vmatpush.msra.mxu0 0.0
        %636 = vmatpush.msra.mxu0 0.0
        %637 = vmatpush.msra.mxu0 0.0
        %638 = vmatpush.msra.mxu0 0.0
        %639 = vmatpush.msra.mxu0 0.0
        %640 = vmatpush.msra.mxu0 %v609
        %641 = vmatpush.msra.mxu0 %v606
        %642 = vmatmul.f32.gmra.mxu0 %v621
        %v643 = vpop.f32.mrf.mxu0
        %v644 = vadd.f32 0.0, %v643
        %645 = vmatmul.f32.gmra.mxu0 %v624
        %v646 = vpop.f32.mrf.mxu0
        %v647 = vadd.f32 0.0, %v646
        %648 = vdwg.mxu0
        %v649 = vmul.f32 %v644, %v617
        %v650 = vmul.f32 %v647, %v618
        %v651 = vsel %vm619, %v649, 0.0
        %v652 = vsel %vm619, %v650, 0.0
        %v653 = vadd.f32 %v651, %v652
        %v654 = vrot.slane %v653, 4
        %v655 = vadd.f32 %v653, %v654
        %v656 = vrot.slane %v655, 2
        %v657 = vadd.f32 %v655, %v656
        %v658 = vrot.slane %v657, 1
        %v659 = vadd.f32 %v657, %v658
        %vm660 = vcmp.ne.f32.partialorder %v659, 0.0
        %v661 = vsel %vm660, %v659, 1.0
        %v662 = vrcp.pop %v661
        %v663 = vmul.f32 %v661, %v662
        %v664 = vsub.f32 2.0, %v663
        %v665 = vmul.f32 %v662, %v664
        %v666 = vsel %vm660, %v665, 0.0
        %v667 = vmul.f32 %v649, %v666
        %v668 = vmul.f32 %v650, %v666
        %v670 = vsel %vm619, %v667, 0
        %v673 = vsel %vm619, %v668, 0
        %675 = vmatpush.msra.mxu0 0.0
        %676 = vmatpush.msra.mxu0 0.0
        %677 = vmatpush.msra.mxu0 0.0
        %678 = vmatpush.msra.mxu0 0.0
        %679 = vmatpush.msra.mxu0 0.0
        %680 = vmatpush.msra.mxu0 0.0
        %681 = vmatpush.msra.mxu0 0.0
        %682 = vmatpush.msra.mxu0 0.0
        %683 = vmatpush.msra.mxu0 0.0
        %684 = vmatpush.msra.mxu0 0.0
        %685 = vmatpush.msra.mxu0 0.0
        %686 = vmatpush.msra.mxu0 0.0
        %687 = vmatpush.msra.mxu0 0.0
        %688 = vmatpush.msra.mxu0 0.0
        %689 = vmatpush.msra.mxu0 %v615
        %690 = vmatpush.msra.mxu0 %v612
        %691 = vmatmul.f32.gmra.mxu0 %v670
        %v692 = vpop.f32.mrf.mxu0
        %v693 = vadd.f32 0.0, %v692
        %694 = vmatmul.f32.gmra.mxu0 %v673
        %v695 = vpop.f32.mrf.mxu0
        %v696 = vadd.f32 0.0, %v695
        %697 = vdwg.mxu0
        %v698 = vmul.f32 %v693, %v617
        %v699 = vmul.f32 %v696, %v618
        %v700 = vsel %vm619, %v698, 0.0
        %v701 = vsel %vm619, %v699, 0.0
        %v702 = vadd.f32 %v700, %v701
        %v703 = vrot.slane %v702, 4
        %v704 = vadd.f32 %v702, %v703
        %v705 = vrot.slane %v704, 2
        %v706 = vadd.f32 %v704, %v705
        %v707 = vrot.slane %v706, 1
        %v708 = vadd.f32 %v706, %v707
        %vm709 = vcmp.ne.f32.partialorder %v708, 0.0
        %v710 = vsel %vm709, %v708, 1.0
        %v711 = vrcp.pop %v710
        %v712 = vmul.f32 %v710, %v711
        %v713 = vsub.f32 2.0, %v712
        %v714 = vmul.f32 %v711, %v713
        %v715 = vsel %vm709, %v714, 0.0
        %v716 = vmul.f32 %v698, %v715
        %v717 = vmul.f32 %v699, %v715
        %v718 = vld [vmem:[%s408] sm:$0xff]
        %v719 = vld [vmem:[%s8] sm:$0xff]
        %v720 = vld [vmem:[%s8 + $0x8] sm:$0xff]
        %v721 = vld [vmem:[%s8 + $0x10] sm:$0xff]
        %v722 = vld [vmem:[%s8 + $0x18] sm:$0xff]
        %vm723 = vcmask 261120
        %v725 = vsel %vm723, %v718, 0
        %727 = vmatpush.msra.mxu0 0.0
        %728 = vmatpush.msra.mxu0 0.0
        %729 = vmatpush.msra.mxu0 0.0
        %730 = vmatpush.msra.mxu0 0.0
        %731 = vmatpush.msra.mxu0 0.0
        %732 = vmatpush.msra.mxu0 0.0
        %733 = vmatpush.msra.mxu0 0.0
        %734 = vmatpush.msra.mxu0 0.0
        %735 = vmatpush.msra.mxu0 0.0
        %736 = vmatpush.msra.mxu0 0.0
        %737 = vmatpush.msra.mxu0 0.0
        %738 = vmatpush.msra.mxu0 0.0
        %739 = vmatpush.msra.mxu0 %v722
        %740 = vmatpush.msra.mxu0 %v721
        %741 = vmatpush.msra.mxu0 %v720
        %742 = vmatpush.msra.mxu0 %v719
        %743 = vmatmul.f32.gmra.mxu0 %v725
        %v744 = vpop.f32.mrf.mxu0
        %v745 = vadd.f32 0.0, %v744
        %746 = vdwg.mxu0
        %v747 = vld [vmem:[%s5] sm:$0xff]
        %v748 = vld [vmem:[%s5 + $0x8] sm:$0xff]
        %v750 = vsel %vm500, %v747, 0
        %v753 = vsel %vm500, %v748, 0
        %755 = vmatpush.msra.mxu0 0.0
        %756 = vmatpush.msra.mxu0 0.0
        %757 = vmatpush.msra.mxu0 0.0
        %758 = vmatpush.msra.mxu0 0.0
        %759 = vmatpush.msra.mxu0 0.0
        %760 = vmatpush.msra.mxu0 0.0
        %761 = vmatpush.msra.mxu0 0.0
        %762 = vmatpush.msra.mxu0 0.0
        %763 = vmatpush.msra.mxu0 0.0
        %764 = vmatpush.msra.mxu0 0.0
        %765 = vmatpush.msra.mxu0 0.0
        %766 = vmatpush.msra.mxu0 0.0
        %767 = vmatpush.msra.mxu0 0.0
        %768 = vmatpush.msra.mxu0 0.0
        %769 = vmatpush.msra.mxu0 0.0
        %770 = vmatpush.msra.mxu0 %v745
        %771 = vmatmul.f32.gmra.mxu0 %v750
        %v772 = vpop.f32.mrf.mxu0
        %v773 = vadd.f32 0.0, %v772
        %774 = vmatmul.f32.gmra.mxu0 %v753
        %v775 = vpop.f32.mrf.mxu0
        %v776 = vadd.f32 0.0, %v775
        %777 = vdwg.mxu0
        %v778 = vld [vmem:[%s9] sm:$0x1]
        %v780 = vperm.slane %v778, 0
        %782 = vxpose.xlu0.b32.start [1/16] %v716, 128
        %783 = vxpose.xlu0.b32.cont [2/16] %v717, 128
        %784 = vxpose.xlu0.b32.cont [3/16] 0.0, 128
        %785 = vxpose.xlu0.b32.cont [4/16] 0.0, 128
        %786 = vxpose.xlu0.b32.cont [5/16] 0.0, 128
        %787 = vxpose.xlu0.b32.cont [6/16] 0.0, 128
        %788 = vxpose.xlu0.b32.cont [7/16] 0.0, 128
        %789 = vxpose.xlu0.b32.cont [8/16] 0.0, 128
        %790 = vxpose.xlu0.b32.cont [9/16] 0.0, 128
        %791 = vxpose.xlu0.b32.cont [10/16] 0.0, 128
        %792 = vxpose.xlu0.b32.cont [11/16] 0.0, 128
        %793 = vxpose.xlu0.b32.cont [12/16] 0.0, 128
        %794 = vxpose.xlu0.b32.cont [13/16] 0.0, 128
        %795 = vxpose.xlu0.b32.cont [14/16] 0.0, 128
        %796 = vxpose.xlu0.b32.cont [15/16] 0.0, 128
        %797 = vxpose.xlu0.b32.end [16/16] 0.0, 128
        %v798 = vpop.trf.xlu0
        %v799 = vpop.trf.xlu0
        %v800 = vpop.trf.xlu0
        %v801 = vpop.trf.xlu0
        %v802 = vpop.trf.xlu0
        %v803 = vpop.trf.xlu0
        %v804 = vpop.trf.xlu0
        %v805 = vpop.trf.xlu0
        %v806 = vpop.trf.xlu0
        %v807 = vpop.trf.xlu0
        %v808 = vpop.trf.xlu0
        %v809 = vpop.trf.xlu0
        %v810 = vpop.trf.xlu0
        %v811 = vpop.trf.xlu0
        %v812 = vpop.trf.xlu0
        %v813 = vpop.trf.xlu0
        %v815 = vsel %vm619, %v798, 0
        %v818 = vsel %vm619, %v799, 0
        %820 = vmatpush.msra.mxu0 0.0
        %821 = vmatpush.msra.mxu0 0.0
        %822 = vmatpush.msra.mxu0 0.0
        %823 = vmatpush.msra.mxu0 0.0
        %824 = vmatpush.msra.mxu0 0.0
        %825 = vmatpush.msra.mxu0 0.0
        %826 = vmatpush.msra.mxu0 0.0
        %827 = vmatpush.msra.mxu0 0.0
        %828 = vmatpush.msra.mxu0 0.0
        %829 = vmatpush.msra.mxu0 0.0
        %830 = vmatpush.msra.mxu0 0.0
        %831 = vmatpush.msra.mxu0 0.0
        %832 = vmatpush.msra.mxu0 0.0
        %833 = vmatpush.msra.mxu0 0.0
        %834 = vmatpush.msra.mxu0 %v776
        %835 = vmatpush.msra.mxu0 %v773
        %836 = vmatmul.f32.gmra.mxu0 %v815
        %v837 = vpop.f32.mrf.mxu0
        %v838 = vadd.f32 %v780, %v837
        %839 = vmatmul.f32.gmra.mxu0 %v818
        %v840 = vpop.f32.mrf.mxu0
        %v841 = vadd.f32 %v780, %v840
        %842 = vdwg.mxu0
        %v843 = vmax.f32 %v838, 0.0
        %v844 = vmax.f32 %v841, 0.0
        %v845 = vld [vmem:[%s10] sm:$0xff]
        %v846 = vld [vmem:[%s10 + $0x8] sm:$0xff]
        %v847 = vld [vmem:[%s10 + $0x10] sm:$0xff]
        %v848 = vld [vmem:[%s10 + $0x18] sm:$0xff]
        %v849 = vld [vmem:[%s10 + $0x20] sm:$0xff]
        %v850 = vld [vmem:[%s10 + $0x28] sm:$0xff]
        %v851 = vld [vmem:[%s10 + $0x30] sm:$0xff]
        %v852 = vld [vmem:[%s10 + $0x38] sm:$0xff]
        %v854 = vsel %vm723, %v844, 0
        %856 = vmatpush.msra.mxu0 0.0
        %857 = vmatpush.msra.mxu0 0.0
        %858 = vmatpush.msra.mxu0 0.0
        %859 = vmatpush.msra.mxu0 0.0
        %860 = vmatpush.msra.mxu0 0.0
        %861 = vmatpush.msra.mxu0 0.0
        %862 = vmatpush.msra.mxu0 0.0
        %863 = vmatpush.msra.mxu0 0.0
        %864 = vmatpush.msra.mxu0 0.0
        %865 = vmatpush.msra.mxu0 0.0
        %866 = vmatpush.msra.mxu0 0.0
        %867 = vmatpush.msra.mxu0 0.0
        %868 = vmatpush.msra.mxu0 %v852
        %869 = vmatpush.msra.mxu0 %v851
        %870 = vmatpush.msra.mxu0 %v850
        %871 = vmatpush.msra.mxu0 %v849
        %872 = vmatmul.f32.gmra.mxu0 %v854
        %v873 = vpop.f32.mrf.mxu0
        %v874 = vadd.f32 0.0, %v873
        %875 = vdwg.mxu0
        %v877 = vsel %vm723, %v843, 0
        %879 = vmatpush.msra.mxu0 0.0
        %880 = vmatpush.msra.mxu0 0.0
        %881 = vmatpush.msra.mxu0 0.0
        %882 = vmatpush.msra.mxu0 0.0
        %883 = vmatpush.msra.mxu0 0.0
        %884 = vmatpush.msra.mxu0 0.0
        %885 = vmatpush.msra.mxu0 0.0
        %886 = vmatpush.msra.mxu0 0.0
        %887 = vmatpush.msra.mxu0 0.0
        %888 = vmatpush.msra.mxu0 0.0
        %889 = vmatpush.msra.mxu0 0.0
        %890 = vmatpush.msra.mxu0 0.0
        %891 = vmatpush.msra.mxu0 %v848
        %892 = vmatpush.msra.mxu0 %v847
        %893 = vmatpush.msra.mxu0 %v846
        %894 = vmatpush.msra.mxu0 %v845
        %895 = vmatmul.f32.gmra.mxu0 %v877
        %v896 = vpop.f32.mrf.mxu0
        %v897 = vadd.f32 %v874, %v896
        %898 = vdwg.mxu0
        %v899 = vld [vmem:[%s11] sm:$0x1]
        %v901 = vperm.slane %v899, 0
        %v903 = vadd.f32 %v897, %v901
        %904 = vst.msk [vmem:[%s404] sm:$0xff] %vm723, %v903
        %s905 = sand.u32 %s291, 1
        %s906 = scalar_lea.sflag [#allocation3], %s905
        %s907 = sand.u32 %s291, 1
        %s908 = smul.addr %s907, 8
        %s909 = scalar_lea.vmem [#allocation2], %s908
        // Predicated region
        $region69: #{tpu_custom_call.1} parent=67 // pred_check
          %p910 = pneg %p301
        $region70: #{tpu_custom_call.1} parent=67 // pred_check_branch
          %912 = sbr.rel (%p910) target = $region72
        $region71: #{tpu_custom_call.1} parent=67 // pred_region
          %914 = vsyncadd %s906, 0
          %s915 = smul.addr %s26, 8
          %s916 = scalar_lea.hbm %s12, %s915
          %s918 = sshll.u32 %s909, 4
          %s919 = int_to_ptr.vmem [resolvable:$true] %s918
          %s920 = sshll.u32 %s916, 4
          %s921 = int_to_ptr.hbm [resolvable:$true] %s920
          %923 = dma.vmem_to_hbm [thread:$0]  %s919, 128, %s921, %s906
        $region72: #{tpu_custom_call.1} parent=67 // pred_fallthru
          _
      $region68: #{tpu_custom_call.1} parent=5 // pred_fallthru
        _
      %p924 = scmp.le.s32.totalorder 2, %s21
      // Predicated region
      $region73: #{tpu_custom_call.1} parent=5 // pred_check
        %p925 = pneg %p924
      $region74: #{tpu_custom_call.1} parent=5 // pred_check_branch
        %927 = sbr.rel (%p925) target = $region76
      $region75: #{tpu_custom_call.1} parent=5 // pred_region
        %s928 = ssub.s32 %s21, 2
        // Predicated region
        $region77: #{tpu_custom_call.1} parent=75 // pred_check
          %p929 = pneg %p307
        $region78: #{tpu_custom_call.1} parent=75 // pred_check_branch
          %931 = sbr.rel (%p929) target = $region80
        $region79: #{tpu_custom_call.1} parent=75 // pred_region
          %s932 = sand.u32 %s292, 1
          %s933 = scalar_lea.sflag [#allocation3], %s932
          %s934 = sand.u32 %s292, 1
          %s935 = smul.addr %s934, 8
          %s936 = scalar_lea.vmem [#allocation2], %s935
          %938 = dma.done %s933, 128
        $region80: #{tpu_custom_call.1} parent=75 // pred_fallthru
          _
      $region76: #{tpu_custom_call.1} parent=5 // pred_fallthru
        _
    $region6: #{tpu_custom_call.1} parent=1 // loop_footer
      %s25 = sadd.s32 1, %s21
    $region7: #{tpu_custom_call.1} parent=1 // loop_footer_branch
      %20 = sbr.rel target = $region3
    $region8: #{tpu_custom_call.1} parent=1 // loop_exit
      _
    %939 = vsyncpa [#allocation3], 1
    %s940 = scalar_lea.sflag [#allocation3], 1
    %941 = vsyncpa %s940, 1

</llo_original>
